<compile_context>
chip_gen: v7x
topology: tpu7x:2x2x1
jax: 0.10.0
libtpu: 0.0.40
codegen_flags: <defaults>
</compile_context>

<pallas_src>
import functools

import jax
import jax.numpy as jnp
from jax.experimental import pallas as pl
from jax.experimental.pallas import tpu as pltpu


XDIM = 14 + 1 + 9   # 24
UDIM = 6            # walker.walk action_spec().shape[0]
HDIM = 32
LANE = 128          # lane-dense output width (mu padded to 128 lanes)


def _policy_kernel(x_ref, w1_ref, b1_ref, w2_ref, b2_ref, w3_ref, b3_ref,
                   mu_ref):
    x = x_ref[...]                                               # [TB, XDIM]
    h1 = jnp.dot(x, w1_ref[...], preferred_element_type=jnp.float32)
    h1 = jnp.maximum(h1 + b1_ref[...], 0.0)                      # [TB, HDIM]
    h2 = jnp.dot(h1, w2_ref[...], preferred_element_type=jnp.float32)
    h2 = jnp.maximum(h2 + b2_ref[...], 0.0)                      # [TB, HDIM]
    mu = jnp.dot(h2, w3_ref[...], preferred_element_type=jnp.float32)
    mu = jnp.tanh(mu + b3_ref[...])                              # [TB, LANE]
    mu_ref[...] = mu.astype(mu_ref.dtype)                        # lane-dense store


def _round_up(n, m):
    return ((n + m - 1) // m) * m


@functools.partial(jax.jit, static_argnames=("block_b",))
def uth_forward(x, params, block_b=512):
    """x: [B, XDIM] f32 -> (mu [B, UDIM], std [B, UDIM])."""
    B = x.shape[0]
    w1, b1, w2, b2, w3, b3, log_std = params

    # Pad the output head to a lane-dense 128-wide slab (zeros -> tanh(0)=0,
    # sliced off afterwards).
    w3p = jnp.zeros((HDIM, LANE), jnp.float32).at[:, :UDIM].set(w3)
    b3p = jnp.zeros((1, LANE), jnp.float32).at[:, :UDIM].set(b3)

    # Batch tiling: large blocks, multiple of 8 sublanes; pad B so every grid
    # step is a full tile.
    tb = min(block_b, _round_up(B, 8))
    bp = _round_up(B, tb)
    if bp != B:
        x = jnp.pad(x, ((0, bp - B), (0, 0)))
    grid = (bp // tb,)

    const = lambda i: (0, 0)   # weights/biases: resident, same block every step
    mu_padded = pl.pallas_call(
        _policy_kernel,
        out_shape=jax.ShapeDtypeStruct((bp, LANE), jnp.float32),
        grid=grid,
        in_specs=[
            pl.BlockSpec((tb, XDIM), lambda i: (i, 0)),   # x tile
            pl.BlockSpec((XDIM, HDIM), const),            # W1
            pl.BlockSpec((1, HDIM), const),               # b1
            pl.BlockSpec((HDIM, HDIM), const),            # W2
            pl.BlockSpec((1, HDIM), const),               # b2
            pl.BlockSpec((HDIM, LANE), const),            # W3 (lane-padded)
            pl.BlockSpec((1, LANE), const),               # b3 (lane-padded)
        ],
        out_specs=pl.BlockSpec((tb, LANE), lambda i: (i, 0)),
        compiler_params=pltpu.CompilerParams(
            dimension_semantics=("parallel",)),
    )(x, w1, b1, w2, b2, w3p, b3p)

    mu = mu_padded[:B, :UDIM]
    # std is batch-constant: compute once outside the kernel.
    std = jnp.broadcast_to(jnp.exp(log_std), (B, UDIM))
    return mu, std


def init_params(key):
    k1, k2, k3 = jax.random.split(key, 3)
    scale1 = 1.0 / jnp.sqrt(XDIM)
    scale2 = 1.0 / jnp.sqrt(HDIM)
    w1 = jax.random.normal(k1, (XDIM, HDIM), jnp.float32) * scale1
    b1 = jnp.zeros((1, HDIM), jnp.float32)
    w2 = jax.random.normal(k2, (HDIM, HDIM), jnp.float32) * scale2
    b2 = jnp.zeros((1, HDIM), jnp.float32)
    w3 = jax.random.normal(k3, (HDIM, UDIM), jnp.float32) * scale2
    b3 = jnp.zeros((1, UDIM), jnp.float32)
    log_std = jnp.full((1, UDIM), -0.5, jnp.float32)   # fixed_var=True
    return (w1, b1, w2, b2, w3, b3, log_std)


def _reference(x, params):
    w1, b1, w2, b2, w3, b3, log_std = params
    h1 = jnp.maximum(x @ w1 + b1, 0.0)
    h2 = jnp.maximum(h1 @ w2 + b2, 0.0)
    mu = jnp.tanh(h2 @ w3 + b3)
    std = jnp.broadcast_to(jnp.exp(log_std), mu.shape)
    return mu, std


if __name__ == "__main__":
    key = jax.random.PRNGKey(0)
    kx, kp = jax.random.split(key)
    params = init_params(kp)

    # Multi-tile case (exercises the batch grid: 256 rows, 128-row tiles).
    B = 256
    x = jax.random.normal(kx, (B, XDIM), jnp.float32)
    mu, std = uth_forward(x, params, block_b=128)
    mu = jax.block_until_ready(mu)
    std = jax.block_until_ready(std)
    mu_ref, std_ref = _reference(x, params)
    assert mu.shape == (B, UDIM) and std.shape == (B, UDIM)
    assert jnp.allclose(mu, mu_ref, atol=1e-5, rtol=1e-5)
    assert jnp.allclose(std, std_ref, atol=1e-6, rtol=1e-6)

    # Small / ragged batch case (B not a multiple of the tile).
    B2 = 10
    x2 = jax.random.normal(kx, (B2, XDIM), jnp.float32)
    mu2, std2 = uth_forward(x2, params, block_b=512)
    mu2 = jax.block_until_ready(mu2)
    std2 = jax.block_until_ready(std2)
    mu2_ref, std2_ref = _reference(x2, params)
    assert mu2.shape == (B2, UDIM) and std2.shape == (B2, UDIM)
    assert jnp.allclose(mu2, mu2_ref, atol=1e-5, rtol=1e-5)
    assert jnp.allclose(std2, std2_ref, atol=1e-6, rtol=1e-6)

    print("KERNEL_OK")
</pallas_src>

<mosaic_0001>
module attributes {stable_mosaic.version = 11 : i64} {
  func.func @_policy_kernel(%arg0: i32, %arg1: memref<128x24xf32, #tpu.memory_space<vmem>>, %arg2: memref<24x32xf32, #tpu.memory_space<vmem>>, %arg3: memref<1x32xf32, #tpu.memory_space<vmem>>, %arg4: memref<32x32xf32, #tpu.memory_space<vmem>>, %arg5: memref<1x32xf32, #tpu.memory_space<vmem>>, %arg6: memref<32x128xf32, #tpu.memory_space<vmem>>, %arg7: memref<1x128xf32, #tpu.memory_space<vmem>>, %arg8: memref<128x128xf32, #tpu.memory_space<vmem>>) attributes {dimension_semantics = [#tpu.dimension_semantics<parallel>], iteration_bounds = array<i64: 2>, scalar_prefetch = 0 : i64, scratch_operands = 0 : i64, tpu.core_type = #tpu.core_type<tc>, window_params = [{transform_indices = @transform_0, window_bounds = array<i64: 128, 24>}, {pipeline_mode = #tpu.pipeline_mode<synchronous>, transform_indices = @transform_1, window_bounds = array<i64: 24, 32>}, {pipeline_mode = #tpu.pipeline_mode<synchronous>, transform_indices = @transform_2, window_bounds = array<i64: 1, 32>}, {pipeline_mode = #tpu.pipeline_mode<synchronous>, transform_indices = @transform_3, window_bounds = array<i64: 32, 32>}, {pipeline_mode = #tpu.pipeline_mode<synchronous>, transform_indices = @transform_4, window_bounds = array<i64: 1, 32>}, {pipeline_mode = #tpu.pipeline_mode<synchronous>, transform_indices = @transform_5, window_bounds = array<i64: 32, 128>}, {pipeline_mode = #tpu.pipeline_mode<synchronous>, transform_indices = @transform_6, window_bounds = array<i64: 1, 128>}, {transform_indices = @transform_7, window_bounds = array<i64: 128, 128>}]} {
    %c0 = arith.constant 0 : index
    %c0_0 = arith.constant 0 : index
    %0 = vector.load %arg1[%c0, %c0_0] : memref<128x24xf32, #tpu.memory_space<vmem>>, vector<128x24xf32>
    %c0_1 = arith.constant 0 : index
    %c0_2 = arith.constant 0 : index
    %1 = vector.load %arg2[%c0_1, %c0_2] : memref<24x32xf32, #tpu.memory_space<vmem>>, vector<24x32xf32>
    %cst = arith.constant dense<0.000000e+00> : vector<128x32xf32>
    %2 = tpu.matmul %0, %1, %cst {dimension_numbers = #tpu.dot_dimension_numbers<[1], [0], [0], [1], [0, 0, 1, 1], [], []>} : vector<128x24xf32>, vector<24x32xf32>, vector<128x32xf32> -> vector<128x32xf32>
    %c0_3 = arith.constant 0 : index
    %c0_4 = arith.constant 0 : index
    %3 = vector.load %arg3[%c0_3, %c0_4] : memref<1x32xf32, #tpu.memory_space<vmem>>, vector<1x32xf32>
    %4 = vector.broadcast %3 : vector<1x32xf32> to vector<128x32xf32>
    %5 = arith.addf %2, %4 : vector<128x32xf32>
    %cst_5 = arith.constant 0.000000e+00 : f32
    %6 = vector.broadcast %cst_5 : f32 to vector<128x32xf32>
    %7 = arith.maximumf %5, %6 : vector<128x32xf32>
    %c0_6 = arith.constant 0 : index
    %c0_7 = arith.constant 0 : index
    %8 = vector.load %arg4[%c0_6, %c0_7] : memref<32x32xf32, #tpu.memory_space<vmem>>, vector<32x32xf32>
    %cst_8 = arith.constant dense<0.000000e+00> : vector<128x32xf32>
    %9 = tpu.matmul %7, %8, %cst_8 {dimension_numbers = #tpu.dot_dimension_numbers<[1], [0], [0], [1], [0, 0, 1, 1], [], []>} : vector<128x32xf32>, vector<32x32xf32>, vector<128x32xf32> -> vector<128x32xf32>
    %c0_9 = arith.constant 0 : index
    %c0_10 = arith.constant 0 : index
    %10 = vector.load %arg5[%c0_9, %c0_10] : memref<1x32xf32, #tpu.memory_space<vmem>>, vector<1x32xf32>
    %11 = vector.broadcast %10 : vector<1x32xf32> to vector<128x32xf32>
    %12 = arith.addf %9, %11 : vector<128x32xf32>
    %cst_11 = arith.constant 0.000000e+00 : f32
    %13 = vector.broadcast %cst_11 : f32 to vector<128x32xf32>
    %14 = arith.maximumf %12, %13 : vector<128x32xf32>
    %c0_12 = arith.constant 0 : index
    %c0_13 = arith.constant 0 : index
    %15 = vector.load %arg6[%c0_12, %c0_13] : memref<32x128xf32, #tpu.memory_space<vmem>>, vector<32x128xf32>
    %cst_14 = arith.constant dense<0.000000e+00> : vector<128x128xf32>
    %16 = tpu.matmul %14, %15, %cst_14 {dimension_numbers = #tpu.dot_dimension_numbers<[1], [0], [0], [1], [0, 0, 1, 1], [], []>} : vector<128x32xf32>, vector<32x128xf32>, vector<128x128xf32> -> vector<128x128xf32>
    %c0_15 = arith.constant 0 : index
    %c0_16 = arith.constant 0 : index
    %17 = vector.load %arg7[%c0_15, %c0_16] : memref<1x128xf32, #tpu.memory_space<vmem>>, vector<1x128xf32>
    %18 = vector.broadcast %17 : vector<1x128xf32> to vector<128x128xf32>
    %19 = arith.addf %16, %18 : vector<128x128xf32>
    %20 = math.tanh %19 : vector<128x128xf32>
    %c0_17 = arith.constant 0 : index
    %c0_18 = arith.constant 0 : index
    %21 = vector.load %arg8[%c0_17, %c0_18] : memref<128x128xf32, #tpu.memory_space<vmem>>, vector<128x128xf32>
    tpu.vector_store %arg8[%c0_17, %c0_18], %20 {strides = array<i32>} : memref<128x128xf32, #tpu.memory_space<vmem>>, vector<128x128xf32>,
    return
  }
  func.func @transform_0(%arg0: i32) -> (i32, i32) {
    %c0_i32 = arith.constant 0 : i32
    %c0_i32_0 = arith.constant 0 : i32
    return %arg0, %c0_i32 : i32, i32
  }
  func.func @transform_1(%arg0: i32) -> (i32, i32) {
    %c0_i32 = arith.constant 0 : i32
    %c0_i32_0 = arith.constant 0 : i32
    %c0_i32_1 = arith.constant 0 : i32
    return %c0_i32, %c0_i32_0 : i32, i32
  }
  func.func @transform_2(%arg0: i32) -> (i32, i32) {
    %c0_i32 = arith.constant 0 : i32
    %c0_i32_0 = arith.constant 0 : i32
    %c0_i32_1 = arith.constant 0 : i32
    return %c0_i32, %c0_i32_0 : i32, i32
  }
  func.func @transform_3(%arg0: i32) -> (i32, i32) {
    %c0_i32 = arith.constant 0 : i32
    %c0_i32_0 = arith.constant 0 : i32
    %c0_i32_1 = arith.constant 0 : i32
    return %c0_i32, %c0_i32_0 : i32, i32
  }
  func.func @transform_4(%arg0: i32) -> (i32, i32) {
    %c0_i32 = arith.constant 0 : i32
    %c0_i32_0 = arith.constant 0 : i32
    %c0_i32_1 = arith.constant 0 : i32
    return %c0_i32, %c0_i32_0 : i32, i32
  }
  func.func @transform_5(%arg0: i32) -> (i32, i32) {
    %c0_i32 = arith.constant 0 : i32
    %c0_i32_0 = arith.constant 0 : i32
    %c0_i32_1 = arith.constant 0 : i32
    return %c0_i32, %c0_i32_0 : i32, i32
  }
  func.func @transform_6(%arg0: i32) -> (i32, i32) {
    %c0_i32 = arith.constant 0 : i32
    %c0_i32_0 = arith.constant 0 : i32
    %c0_i32_1 = arith.constant 0 : i32
    return %c0_i32, %c0_i32_0 : i32, i32
  }
  func.func @transform_7(%arg0: i32) -> (i32, i32) {
    %c0_i32 = arith.constant 0 : i32
    %c0_i32_0 = arith.constant 0 : i32
    return %arg0, %c0_i32 : i32, i32
  }
}

</mosaic_0001>

<llo_original>
// kernel: uth_forward.1
$region0: #{uth_forward.1}
  #allocation0 [shape = 'u32[]', space=smem, size = 0x4, offset = 0x4, fixed_abs, tag = 'smem constant byte address 0x4 - core index']
  #allocation1 [shape = 'u32[144,128]{1,0:T(1,128)}', space=vmem, size = 0x12000, scoped, tag = 'internal scratch']
  %s0 = inlined_call_operand.vmem [shape: f32[256,24], index: 0, kind: input, shape index: {}]
  %s1 = inlined_call_operand.vmem [shape: f32[24,32], index: 1, kind: input, shape index: {}]
  %s2 = inlined_call_operand.vmem [shape: f32[1,32], index: 2, kind: input, shape index: {}]
  %s3 = inlined_call_operand.vmem [shape: f32[32,32], index: 3, kind: input, shape index: {}]
  %s4 = inlined_call_operand.vmem [shape: f32[1,32], index: 4, kind: input, shape index: {}]
  %s5 = inlined_call_operand.vmem [shape: f32[32,128], index: 5, kind: input, shape index: {}]
  %s6 = inlined_call_operand.vmem [shape: f32[1,128], index: 6, kind: input, shape index: {}]
  %s7 = inlined_call_operand.vmem [shape: f32[256,128], index: 7, kind: output, shape index: {}]
  %s8 = sld [smem:[#allocation0]]
  $region61: #{uth_forward.1} parent=0
    _
  %s10 = ssub.s32 1, %s8
  %s11 = scalar_select 0, %s10, %s8
  loop: start=0, step=1, limit=4
  $region2: #{uth_forward.1} parent=0 // loop_pre_header
    _
  $region3: #{uth_forward.1} parent=0 // loop_header
    %s13 = sphi 0, %s17
    %p14 = scmp.ge.s32.totalorder %s13, 4
    %s23 = sphi 0, %s25
    %s26 = sphi 0, %s23
    %s27 = sphi 0, %s26
    %s43 = sphi 0, %s27
    %s47 = sphi 0, %s47
    %s49 = sphi 0, %s47
    %s50 = sphi 0, %s49
    %s64 = sphi 0, %s50
    %s68 = sphi 0, %s68
    %s70 = sphi 0, %s68
    %s71 = sphi 0, %s70
    %s85 = sphi 0, %s71
    %s89 = sphi 0, %s89
    %s91 = sphi 0, %s89
    %s92 = sphi 0, %s91
    %s106 = sphi 0, %s92
    %s110 = sphi 0, %s110
    %s112 = sphi 0, %s110
    %s113 = sphi 0, %s112
    %s127 = sphi 0, %s113
    %s131 = sphi 0, %s131
    %s133 = sphi 0, %s131
    %s134 = sphi 0, %s133
    %s148 = sphi 0, %s134
    %s152 = sphi 0, %s152
    %s154 = sphi 0, %s152
    %s155 = sphi 0, %s154
    %s169 = sphi 0, %s155
    %s175 = sphi 0, %s177
    %s178 = sphi 0, %s175
    %s179 = sphi 0, %s178
    %s195 = sphi 0, %s179
  $region4: #{uth_forward.1} parent=0 // loop_header_branch
    %16 = sbr.rel (%p14) target = $region8
  $region5: #{uth_forward.1} parent=0 // loop_body
    %s18 = ssub.s32 %s13, 1
    %s19 = ssub.s32 %s13, 2
    %s20 = sadd.s32 %s13, 1
    %s21 = ssub.s32 %s13, %s20
    %p22 = scmp.eq.s32.totalorder %s21, 0
    %s24 = sadd.s32 %s23, 1
    %s25 = scalar_select %p22, %s23, %s24
    %p28 = pneg %p22
    %p29 = scmp.eq.s32.totalorder %s13, 1
    %p30 = por %p28, %p29
    %p31 = scmp.ne.s32.totalorder %s23, %s26
    %p32 = scmp.eq.s32.totalorder %s13, 0
    %p33 = por %p31, %p32
    %p34 = scmp.ne.s32.totalorder %s23, %s26
    %p35 = scmp.eq.s32.totalorder %s18, 1
    %p36 = por %p34, %p35
    %p37 = scmp.ne.s32.totalorder %s26, %s27
    %p38 = scmp.eq.s32.totalorder %s18, 0
    %p39 = por %p37, %p38
    %p40 = scmp.ne.s32.totalorder %s26, %s27
    %p41 = scmp.eq.s32.totalorder %s19, 1
    %p42 = por %p40, %p41
    %p44 = scmp.ne.s32.totalorder %s27, %s43
    %p45 = scmp.eq.s32.totalorder %s19, 0
    %p46 = por %p44, %p45
    %s48 = sadd.s32 %s47, 1
    %p51 = scmp.eq.s32.totalorder %s13, 1
    %p52 = scmp.ne.s32.totalorder %s47, %s49
    %p53 = scmp.eq.s32.totalorder %s13, 0
    %p54 = por %p52, %p53
    %p55 = scmp.ne.s32.totalorder %s47, %s49
    %p56 = scmp.eq.s32.totalorder %s18, 1
    %p57 = por %p55, %p56
    %p58 = scmp.ne.s32.totalorder %s49, %s50
    %p59 = scmp.eq.s32.totalorder %s18, 0
    %p60 = por %p58, %p59
    %p61 = scmp.ne.s32.totalorder %s49, %s50
    %p62 = scmp.eq.s32.totalorder %s19, 1
    %p63 = por %p61, %p62
    %p65 = scmp.ne.s32.totalorder %s50, %s64
    %p66 = scmp.eq.s32.totalorder %s19, 0
    %p67 = por %p65, %p66
    %s69 = sadd.s32 %s68, 1
    %p72 = scmp.eq.s32.totalorder %s13, 1
    %p73 = scmp.ne.s32.totalorder %s68, %s70
    %p74 = scmp.eq.s32.totalorder %s13, 0
    %p75 = por %p73, %p74
    %p76 = scmp.ne.s32.totalorder %s68, %s70
    %p77 = scmp.eq.s32.totalorder %s18, 1
    %p78 = por %p76, %p77
    %p79 = scmp.ne.s32.totalorder %s70, %s71
    %p80 = scmp.eq.s32.totalorder %s18, 0
    %p81 = por %p79, %p80
    %p82 = scmp.ne.s32.totalorder %s70, %s71
    %p83 = scmp.eq.s32.totalorder %s19, 1
    %p84 = por %p82, %p83
    %p86 = scmp.ne.s32.totalorder %s71, %s85
    %p87 = scmp.eq.s32.totalorder %s19, 0
    %p88 = por %p86, %p87
    %s90 = sadd.s32 %s89, 1
    %p93 = scmp.eq.s32.totalorder %s13, 1
    %p94 = scmp.ne.s32.totalorder %s89, %s91
    %p95 = scmp.eq.s32.totalorder %s13, 0
    %p96 = por %p94, %p95
    %p97 = scmp.ne.s32.totalorder %s89, %s91
    %p98 = scmp.eq.s32.totalorder %s18, 1
    %p99 = por %p97, %p98
    %p100 = scmp.ne.s32.totalorder %s91, %s92
    %p101 = scmp.eq.s32.totalorder %s18, 0
    %p102 = por %p100, %p101
    %p103 = scmp.ne.s32.totalorder %s91, %s92
    %p104 = scmp.eq.s32.totalorder %s19, 1
    %p105 = por %p103, %p104
    %p107 = scmp.ne.s32.totalorder %s92, %s106
    %p108 = scmp.eq.s32.totalorder %s19, 0
    %p109 = por %p107, %p108
    %s111 = sadd.s32 %s110, 1
    %p114 = scmp.eq.s32.totalorder %s13, 1
    %p115 = scmp.ne.s32.totalorder %s110, %s112
    %p116 = scmp.eq.s32.totalorder %s13, 0
    %p117 = por %p115, %p116
    %p118 = scmp.ne.s32.totalorder %s110, %s112
    %p119 = scmp.eq.s32.totalorder %s18, 1
    %p120 = por %p118, %p119
    %p121 = scmp.ne.s32.totalorder %s112, %s113
    %p122 = scmp.eq.s32.totalorder %s18, 0
    %p123 = por %p121, %p122
    %p124 = scmp.ne.s32.totalorder %s112, %s113
    %p125 = scmp.eq.s32.totalorder %s19, 1
    %p126 = por %p124, %p125
    %p128 = scmp.ne.s32.totalorder %s113, %s127
    %p129 = scmp.eq.s32.totalorder %s19, 0
    %p130 = por %p128, %p129
    %s132 = sadd.s32 %s131, 1
    %p135 = scmp.eq.s32.totalorder %s13, 1
    %p136 = scmp.ne.s32.totalorder %s131, %s133
    %p137 = scmp.eq.s32.totalorder %s13, 0
    %p138 = por %p136, %p137
    %p139 = scmp.ne.s32.totalorder %s131, %s133
    %p140 = scmp.eq.s32.totalorder %s18, 1
    %p141 = por %p139, %p140
    %p142 = scmp.ne.s32.totalorder %s133, %s134
    %p143 = scmp.eq.s32.totalorder %s18, 0
    %p144 = por %p142, %p143
    %p145 = scmp.ne.s32.totalorder %s133, %s134
    %p146 = scmp.eq.s32.totalorder %s19, 1
    %p147 = por %p145, %p146
    %p149 = scmp.ne.s32.totalorder %s134, %s148
    %p150 = scmp.eq.s32.totalorder %s19, 0
    %p151 = por %p149, %p150
    %s153 = sadd.s32 %s152, 1
    %p156 = scmp.eq.s32.totalorder %s13, 1
    %p157 = scmp.ne.s32.totalorder %s152, %s154
    %p158 = scmp.eq.s32.totalorder %s13, 0
    %p159 = por %p157, %p158
    %p160 = scmp.ne.s32.totalorder %s152, %s154
    %p161 = scmp.eq.s32.totalorder %s18, 1
    %p162 = por %p160, %p161
    %p163 = scmp.ne.s32.totalorder %s154, %s155
    %p164 = scmp.eq.s32.totalorder %s18, 0
    %p165 = por %p163, %p164
    %p166 = scmp.ne.s32.totalorder %s154, %s155
    %p167 = scmp.eq.s32.totalorder %s19, 1
    %p168 = por %p166, %p167
    %p170 = scmp.ne.s32.totalorder %s155, %s169
    %p171 = scmp.eq.s32.totalorder %s19, 0
    %p172 = por %p170, %p171
    %s173 = ssub.s32 %s13, %s20
    %p174 = scmp.eq.s32.totalorder %s173, 0
    %s176 = sadd.s32 %s175, 1
    %s177 = scalar_select %p174, %s175, %s176
    %p180 = pneg %p174
    %p181 = scmp.eq.s32.totalorder %s13, 1
    %p182 = por %p180, %p181
    %p183 = scmp.ne.s32.totalorder %s175, %s178
    %p184 = scmp.eq.s32.totalorder %s13, 0
    %p185 = por %p183, %p184
    %p186 = scmp.ne.s32.totalorder %s175, %s178
    %p187 = scmp.eq.s32.totalorder %s18, 1
    %p188 = por %p186, %p187
    %p189 = scmp.ne.s32.totalorder %s178, %s179
    %p190 = scmp.eq.s32.totalorder %s18, 0
    %p191 = por %p189, %p190
    %p192 = scmp.ne.s32.totalorder %s178, %s179
    %p193 = scmp.eq.s32.totalorder %s19, 1
    %p194 = por %p192, %p193
    %p196 = scmp.ne.s32.totalorder %s179, %s195
    %p197 = scmp.eq.s32.totalorder %s19, 0
    %p198 = por %p196, %p197
    %p199 = scmp.le.s32.totalorder 1, %s13
    %p200 = scmp.lt.s32.totalorder %s13, 3
    %p201 = pnand %p199, %p200
    %p202 = pneg %p201
    // Predicated region
    $region9: #{uth_forward.1} parent=5 // pred_check
      _
    $region10: #{uth_forward.1} parent=5 // pred_check_branch
      %204 = sbr.rel (%p201) target = $region12
    $region11: #{uth_forward.1} parent=5 // pred_region
      %s205 = ssub.s32 %s13, 1
      // Predicated region
      $region13: #{uth_forward.1} parent=11 // pred_check
        %p206 = pneg %p60
      $region14: #{uth_forward.1} parent=11 // pred_check_branch
        %208 = sbr.rel (%p206) target = $region16
      $region15: #{uth_forward.1} parent=11 // pred_region
        _
      $region16: #{uth_forward.1} parent=11 // pred_fallthru
        _
      // Predicated region
      $region17: #{uth_forward.1} parent=11 // pred_check
        %p209 = pneg %p81
      $region18: #{uth_forward.1} parent=11 // pred_check_branch
        %211 = sbr.rel (%p209) target = $region20
      $region19: #{uth_forward.1} parent=11 // pred_region
        _
      $region20: #{uth_forward.1} parent=11 // pred_fallthru
        _
      // Predicated region
      $region21: #{uth_forward.1} parent=11 // pred_check
        %p212 = pneg %p102
      $region22: #{uth_forward.1} parent=11 // pred_check_branch
        %214 = sbr.rel (%p212) target = $region24
      $region23: #{uth_forward.1} parent=11 // pred_region
        _
      $region24: #{uth_forward.1} parent=11 // pred_fallthru
        _
      // Predicated region
      $region25: #{uth_forward.1} parent=11 // pred_check
        %p215 = pneg %p123
      $region26: #{uth_forward.1} parent=11 // pred_check_branch
        %217 = sbr.rel (%p215) target = $region28
      $region27: #{uth_forward.1} parent=11 // pred_region
        _
      $region28: #{uth_forward.1} parent=11 // pred_fallthru
        _
      // Predicated region
      $region29: #{uth_forward.1} parent=11 // pred_check
        %p218 = pneg %p144
      $region30: #{uth_forward.1} parent=11 // pred_check_branch
        %220 = sbr.rel (%p218) target = $region32
      $region31: #{uth_forward.1} parent=11 // pred_region
        _
      $region32: #{uth_forward.1} parent=11 // pred_fallthru
        _
      // Predicated region
      $region33: #{uth_forward.1} parent=11 // pred_check
        %p221 = pneg %p165
      $region34: #{uth_forward.1} parent=11 // pred_check_branch
        %223 = sbr.rel (%p221) target = $region36
      $region35: #{uth_forward.1} parent=11 // pred_region
        _
      $region36: #{uth_forward.1} parent=11 // pred_fallthru
        _
    $region12: #{uth_forward.1} parent=5 // pred_fallthru
      _
    %p224 = scmp.lt.s32.totalorder %s13, 2
    // Predicated region
    $region37: #{uth_forward.1} parent=5 // pred_check
      %p225 = pneg %p224
    $region38: #{uth_forward.1} parent=5 // pred_check_branch
      %227 = sbr.rel (%p225) target = $region40
    $region39: #{uth_forward.1} parent=5 // pred_region
      // Predicated region
      $region41: #{uth_forward.1} parent=39 // pred_check
        %p228 = pneg %p33
      $region42: #{uth_forward.1} parent=39 // pred_check_branch
        %230 = sbr.rel (%p228) target = $region44
      $region43: #{uth_forward.1} parent=39 // pred_region
        %s231 = smul.u32 16, %s13
        %p232 = scmp.lt.s32.totalorder %s231, 31
        %s233 = scalar_select %p232, %s231, 31
        %s234 = smul.addr %s233, 8
        %s235 = scalar_lea.vmem %s0, %s234
        %s236 = smul.u32 16, %s13
      $region44: #{uth_forward.1} parent=39 // pred_fallthru
        _
    $region40: #{uth_forward.1} parent=5 // pred_fallthru
      _
    %p237 = scmp.le.s32.totalorder 1, %s13
    %p238 = scmp.lt.s32.totalorder %s13, 3
    %p239 = pnand %p237, %p238
    %p240 = pneg %p239
    // Predicated region
    $region45: #{uth_forward.1} parent=5 // pred_check
      _
    $region46: #{uth_forward.1} parent=5 // pred_check_branch
      %242 = sbr.rel (%p239) target = $region48
    $region47: #{uth_forward.1} parent=5 // pred_region
      %s243 = ssub.s32 %s13, 1
      %s244 = smul.u32 16, %s18
      %p245 = scmp.lt.s32.totalorder %s244, 31
      %s246 = scalar_select %p245, %s244, 31
      %s247 = smul.addr %s246, 8
      %s248 = scalar_lea.vmem %s0, %s247
      %p249 = pneg %p39
      %p250 = pneg %p36
      %p251 = pneg %p60
      %p252 = pneg %p57
      %p253 = pneg %p81
      %p254 = pneg %p78
      %p255 = pneg %p102
      %p256 = pneg %p99
      %p257 = pneg %p123
      %p258 = pneg %p120
      %p259 = pneg %p144
      %p260 = pneg %p141
      %p261 = pneg %p165
      %p262 = pneg %p162
      %p263 = pneg %p191
      %p264 = pneg %p188
      %s265 = smul.u32 16, %s18
      %p266 = scmp.lt.s32.totalorder %s265, 31
      %s267 = scalar_select %p266, %s265, 31
      %s268 = smul.addr %s267, 8
      %s269 = scalar_lea.vmem %s7, %s268
      %s270 = smul.u32 16, %s18
      %p271 = scmp.lt.s32.totalorder %s270, 31
      %s272 = scalar_select %p271, %s270, 31
      %s273 = smul.addr %s272, 8
      %s274 = scalar_lea.vmem %s0, %s273
      %s275 = smul.u32 16, %s18
      %s276 = smul.u32 16, %s18
      %p277 = scmp.lt.s32.totalorder %s276, 31
      %s278 = scalar_select %p277, %s276, 31
      %s279 = smul.addr %s278, 8
      %s280 = scalar_lea.vmem %s7, %s279
      %s281 = smul.u32 16, %s18
      %v282 = vld [vmem:[%s274] sm:$0xff]
      %v283 = vld [vmem:[%s274 + $0x8] sm:$0xff]
      %v284 = vld [vmem:[%s274 + $0x10] sm:$0xff]
      %v285 = vld [vmem:[%s274 + $0x18] sm:$0xff]
      %v286 = vld [vmem:[%s274 + $0x20] sm:$0xff]
      %v287 = vld [vmem:[%s274 + $0x28] sm:$0xff]
      %v288 = vld [vmem:[%s274 + $0x30] sm:$0xff]
      %v289 = vld [vmem:[%s274 + $0x38] sm:$0xff]
      %v290 = vld [vmem:[%s274 + $0x40] sm:$0xff]
      %v291 = vld [vmem:[%s274 + $0x48] sm:$0xff]
      %v292 = vld [vmem:[%s274 + $0x50] sm:$0xff]
      %v293 = vld [vmem:[%s274 + $0x58] sm:$0xff]
      %v294 = vld [vmem:[%s274 + $0x60] sm:$0xff]
      %v295 = vld [vmem:[%s274 + $0x68] sm:$0xff]
      %v296 = vld [vmem:[%s274 + $0x70] sm:$0xff]
      %v297 = vld [vmem:[%s274 + $0x78] sm:$0xff]
      %v298 = vld [vmem:[%s1] sm:$0xff]
      %v299 = vld [vmem:[%s1 + $0x8] sm:$0xff]
      %v300 = vld [vmem:[%s1 + $0x10] sm:$0xff]
      %v301 = vld [vmem:[%s2] sm:$0x1]
      %v303 = vlaneseq
      %v304 = vshrl.u32 %v303, 7
      %v305 = vsub.s32 0, %v304
      %v306 = vrot.slane %v301, %v305
      %vm308 = vcmask 195584
      %v310 = vsel %vm308, %v282, 0
      %v313 = vsel %vm308, %v283, 0
      %v316 = vsel %vm308, %v284, 0
      %v319 = vsel %vm308, %v285, 0
      %v322 = vsel %vm308, %v286, 0
      %v325 = vsel %vm308, %v287, 0
      %v328 = vsel %vm308, %v288, 0
      %v331 = vsel %vm308, %v289, 0
      %v334 = vsel %vm308, %v290, 0
      %v337 = vsel %vm308, %v291, 0
      %v340 = vsel %vm308, %v292, 0
      %v343 = vsel %vm308, %v293, 0
      %v346 = vsel %vm308, %v294, 0
      %v349 = vsel %vm308, %v295, 0
      %v352 = vsel %vm308, %v296, 0
      %v355 = vsel %vm308, %v297, 0
      %357 = vmatprep.subr.mxu0 0.0
      %358 = vmatpush1.msra.mxu0 %v298
      %359 = vmatprep.subr.mxu0 0.0
      %360 = vmatpush1.msra.mxu0 %v299
      %361 = vmatprep.subr.mxu0 0.0
      %362 = vmatpush1.msra.mxu0 %v300
      %363 = vmatprep.subr.mxu0 0.0
      %364 = vmatpush1.msra.mxu0 0.0
      %365 = vmatprep.subr.mxu0 0.0
      %366 = vmatpush1.msra.mxu0 0.0
      %367 = vmatprep.subr.mxu0 0.0
      %368 = vmatpush1.msra.mxu0 0.0
      %369 = vmatprep.subr.mxu0 0.0
      %370 = vmatpush1.msra.mxu0 0.0
      %371 = vmatprep.subr.mxu0 0.0
      %372 = vmatpush1.msra.mxu0 0.0
      %373 = vmatprep.subr.mxu0 0.0
      %374 = vmatpush1.msra.mxu0 0.0
      %375 = vmatprep.subr.mxu0 0.0
      %376 = vmatpush1.msra.mxu0 0.0
      %377 = vmatprep.subr.mxu0 0.0
      %378 = vmatpush1.msra.mxu0 0.0
      %379 = vmatprep.subr.mxu0 0.0
      %380 = vmatpush1.msra.mxu0 0.0
      %381 = vmatprep.subr.mxu0 0.0
      %382 = vmatpush1.msra.mxu0 0.0
      %383 = vmatprep.subr.mxu0 0.0
      %384 = vmatpush1.msra.mxu0 0.0
      %385 = vmatprep.subr.mxu0 0.0
      %386 = vmatpush1.msra.mxu0 0.0
      %387 = vmatprep.subr.mxu0 0.0
      %388 = vmatpush1.msra.mxu0 0.0
      %389 = vmatprep.subr.mxu0 0.0
      %390 = vmatpush1.msra.mxu0 0.0
      %391 = vmatprep.subr.mxu0 0.0
      %392 = vmatpush1.msra.mxu0 0.0
      %393 = vmatprep.subr.mxu0 0.0
      %394 = vmatpush1.msra.mxu0 0.0
      %395 = vmatprep.subr.mxu0 0.0
      %396 = vmatpush1.msra.mxu0 0.0
      %397 = vmatprep.subr.mxu0 0.0
      %398 = vmatpush1.msra.mxu0 0.0
      %399 = vmatprep.subr.mxu0 0.0
      %400 = vmatpush1.msra.mxu0 0.0
      %401 = vmatprep.subr.mxu0 0.0
      %402 = vmatpush1.msra.mxu0 0.0
      %403 = vmatprep.subr.mxu0 0.0
      %404 = vmatpush1.msra.mxu0 0.0
      %405 = vmatprep.subr.mxu0 0.0
      %406 = vmatpush1.msra.mxu0 0.0
      %407 = vmatprep.subr.mxu0 0.0
      %408 = vmatpush1.msra.mxu0 0.0
      %409 = vmatprep.subr.mxu0 0.0
      %410 = vmatpush1.msra.mxu0 0.0
      %411 = vmatprep.subr.mxu0 0.0
      %412 = vmatpush1.msra.mxu0 0.0
      %413 = vmatprep.subr.mxu0 0.0
      %414 = vmatpush1.msra.mxu0 0.0
      %415 = vmatprep.subr.mxu0 0.0
      %416 = vmatpush1.msra.mxu0 0.0
      %417 = vmatprep.subr.mxu0 0.0
      %418 = vmatpush1.msra.mxu0 0.0
      %419 = vmatprep.subr.mxu0 0.0
      %420 = vmatpush1.msra.mxu0 0.0
      %421 = vmatprep.mubr.f32.mxu0 0.0
      %422 = vmatmul.mubr.f32.gmra.mrb[0].mxu0 %v310
      %v423 = vpop.f32.mrb[0].mxu0
      %v424 = vadd.f32 %v306, %v423
      %v425 = vpop.f32.mrb[0].mxu0
      %426 = vmatprep.mubr.f32.mxu0 0.0
      %427 = vmatmul.mubr.f32.gmra.mrb[0].mxu0 %v313
      %v428 = vpop.f32.mrb[0].mxu0
      %v429 = vadd.f32 %v306, %v428
      %v430 = vpop.f32.mrb[0].mxu0
      %431 = vmatprep.mubr.f32.mxu0 0.0
      %432 = vmatmul.mubr.f32.gmra.mrb[0].mxu0 %v316
      %v433 = vpop.f32.mrb[0].mxu0
      %v434 = vadd.f32 %v306, %v433
      %v435 = vpop.f32.mrb[0].mxu0
      %436 = vmatprep.mubr.f32.mxu0 0.0
      %437 = vmatmul.mubr.f32.gmra.mrb[0].mxu0 %v319
      %v438 = vpop.f32.mrb[0].mxu0
      %v439 = vadd.f32 %v306, %v438
      %v440 = vpop.f32.mrb[0].mxu0
      %441 = vmatprep.mubr.f32.mxu0 0.0
      %442 = vmatmul.mubr.f32.gmra.mrb[0].mxu0 %v322
      %v443 = vpop.f32.mrb[0].mxu0
      %v444 = vadd.f32 %v306, %v443
      %v445 = vpop.f32.mrb[0].mxu0
      %446 = vmatprep.mubr.f32.mxu0 0.0
      %447 = vmatmul.mubr.f32.gmra.mrb[0].mxu0 %v325
      %v448 = vpop.f32.mrb[0].mxu0
      %v449 = vadd.f32 %v306, %v448
      %v450 = vpop.f32.mrb[0].mxu0
      %451 = vmatprep.mubr.f32.mxu0 0.0
      %452 = vmatmul.mubr.f32.gmra.mrb[0].mxu0 %v328
      %v453 = vpop.f32.mrb[0].mxu0
      %v454 = vadd.f32 %v306, %v453
      %v455 = vpop.f32.mrb[0].mxu0
      %456 = vmatprep.mubr.f32.mxu0 0.0
      %457 = vmatmul.mubr.f32.gmra.mrb[0].mxu0 %v331
      %v458 = vpop.f32.mrb[0].mxu0
      %v459 = vadd.f32 %v306, %v458
      %v460 = vpop.f32.mrb[0].mxu0
      %461 = vmatprep.mubr.f32.mxu0 0.0
      %462 = vmatmul.mubr.f32.gmra.mrb[0].mxu0 %v334
      %v463 = vpop.f32.mrb[0].mxu0
      %v464 = vadd.f32 %v306, %v463
      %v465 = vpop.f32.mrb[0].mxu0
      %466 = vmatprep.mubr.f32.mxu0 0.0
      %467 = vmatmul.mubr.f32.gmra.mrb[0].mxu0 %v337
      %v468 = vpop.f32.mrb[0].mxu0
      %v469 = vadd.f32 %v306, %v468
      %v470 = vpop.f32.mrb[0].mxu0
      %471 = vmatprep.mubr.f32.mxu0 0.0
      %472 = vmatmul.mubr.f32.gmra.mrb[0].mxu0 %v340
      %v473 = vpop.f32.mrb[0].mxu0
      %v474 = vadd.f32 %v306, %v473
      %v475 = vpop.f32.mrb[0].mxu0
      %476 = vmatprep.mubr.f32.mxu0 0.0
      %477 = vmatmul.mubr.f32.gmra.mrb[0].mxu0 %v343
      %v478 = vpop.f32.mrb[0].mxu0
      %v479 = vadd.f32 %v306, %v478
      %v480 = vpop.f32.mrb[0].mxu0
      %481 = vmatprep.mubr.f32.mxu0 0.0
      %482 = vmatmul.mubr.f32.gmra.mrb[0].mxu0 %v346
      %v483 = vpop.f32.mrb[0].mxu0
      %v484 = vadd.f32 %v306, %v483
      %v485 = vpop.f32.mrb[0].mxu0
      %486 = vmatprep.mubr.f32.mxu0 0.0
      %487 = vmatmul.mubr.f32.gmra.mrb[0].mxu0 %v349
      %v488 = vpop.f32.mrb[0].mxu0
      %v489 = vadd.f32 %v306, %v488
      %v490 = vpop.f32.mrb[0].mxu0
      %491 = vmatprep.mubr.f32.mxu0 0.0
      %492 = vmatmul.mubr.f32.gmra.mrb[0].mxu0 %v352
      %v493 = vpop.f32.mrb[0].mxu0
      %v494 = vadd.f32 %v306, %v493
      %v495 = vpop.f32.mrb[0].mxu0
      %496 = vmatprep.mubr.f32.mxu0 0.0
      %497 = vmatmul.mubr.f32.gmra.mrb[0].mxu0 %v355
      %v498 = vpop.f32.mrb[0].mxu0
      %v499 = vadd.f32 %v306, %v498
      %v500 = vpop.f32.mrb[0].mxu0
      %501 = vdwg.mxu0
      %v502 = vmax.f32 %v424, 0.0
      %v503 = vmax.f32 %v429, 0.0
      %v504 = vmax.f32 %v434, 0.0
      %v505 = vmax.f32 %v439, 0.0
      %v506 = vmax.f32 %v444, 0.0
      %v507 = vmax.f32 %v449, 0.0
      %v508 = vmax.f32 %v454, 0.0
      %v509 = vmax.f32 %v459, 0.0
      %v510 = vmax.f32 %v464, 0.0
      %v511 = vmax.f32 %v469, 0.0
      %v512 = vmax.f32 %v474, 0.0
      %v513 = vmax.f32 %v479, 0.0
      %v514 = vmax.f32 %v484, 0.0
      %v515 = vmax.f32 %v489, 0.0
      %v516 = vmax.f32 %v494, 0.0
      %v517 = vmax.f32 %v499, 0.0
      %v518 = vld [vmem:[%s3] sm:$0xff]
      %v519 = vld [vmem:[%s3 + $0x8] sm:$0xff]
      %v520 = vld [vmem:[%s3 + $0x10] sm:$0xff]
      %v521 = vld [vmem:[%s3 + $0x18] sm:$0xff]
      %v522 = vld [vmem:[%s4] sm:$0x1]
      %v524 = vlaneseq
      %v525 = vshrl.u32 %v524, 7
      %v526 = vsub.s32 0, %v525
      %v527 = vrot.slane %v522, %v526
      %vm529 = vcmask 261120
      %v531 = vsel %vm529, %v502, 0
      %v534 = vsel %vm529, %v503, 0
      %v537 = vsel %vm529, %v504, 0
      %v540 = vsel %vm529, %v505, 0
      %v543 = vsel %vm529, %v506, 0
      %v546 = vsel %vm529, %v507, 0
      %v549 = vsel %vm529, %v508, 0
      %v552 = vsel %vm529, %v509, 0
      %v555 = vsel %vm529, %v510, 0
      %v558 = vsel %vm529, %v511, 0
      %v561 = vsel %vm529, %v512, 0
      %v564 = vsel %vm529, %v513, 0
      %v567 = vsel %vm529, %v514, 0
      %v570 = vsel %vm529, %v515, 0
      %v573 = vsel %vm529, %v516, 0
      %v576 = vsel %vm529, %v517, 0
      %578 = vmatprep.subr.mxu0 0.0
      %579 = vmatpush1.msra.mxu0 %v518
      %580 = vmatprep.subr.mxu0 0.0
      %581 = vmatpush1.msra.mxu0 %v519
      %582 = vmatprep.subr.mxu0 0.0
      %583 = vmatpush1.msra.mxu0 %v520
      %584 = vmatprep.subr.mxu0 0.0
      %585 = vmatpush1.msra.mxu0 %v521
      %586 = vmatprep.subr.mxu0 0.0
      %587 = vmatpush1.msra.mxu0 0.0
      %588 = vmatprep.subr.mxu0 0.0
      %589 = vmatpush1.msra.mxu0 0.0
      %590 = vmatprep.subr.mxu0 0.0
      %591 = vmatpush1.msra.mxu0 0.0
      %592 = vmatprep.subr.mxu0 0.0
      %593 = vmatpush1.msra.mxu0 0.0
      %594 = vmatprep.subr.mxu0 0.0
      %595 = vmatpush1.msra.mxu0 0.0
      %596 = vmatprep.subr.mxu0 0.0
      %597 = vmatpush1.msra.mxu0 0.0
      %598 = vmatprep.subr.mxu0 0.0
      %599 = vmatpush1.msra.mxu0 0.0
      %600 = vmatprep.subr.mxu0 0.0
      %601 = vmatpush1.msra.mxu0 0.0
      %602 = vmatprep.subr.mxu0 0.0
      %603 = vmatpush1.msra.mxu0 0.0
      %604 = vmatprep.subr.mxu0 0.0
      %605 = vmatpush1.msra.mxu0 0.0
      %606 = vmatprep.subr.mxu0 0.0
      %607 = vmatpush1.msra.mxu0 0.0
      %608 = vmatprep.subr.mxu0 0.0
      %609 = vmatpush1.msra.mxu0 0.0
      %610 = vmatprep.subr.mxu0 0.0
      %611 = vmatpush1.msra.mxu0 0.0
      %612 = vmatprep.subr.mxu0 0.0
      %613 = vmatpush1.msra.mxu0 0.0
      %614 = vmatprep.subr.mxu0 0.0
      %615 = vmatpush1.msra.mxu0 0.0
      %616 = vmatprep.subr.mxu0 0.0
      %617 = vmatpush1.msra.mxu0 0.0
      %618 = vmatprep.subr.mxu0 0.0
      %619 = vmatpush1.msra.mxu0 0.0
      %620 = vmatprep.subr.mxu0 0.0
      %621 = vmatpush1.msra.mxu0 0.0
      %622 = vmatprep.subr.mxu0 0.0
      %623 = vmatpush1.msra.mxu0 0.0
      %624 = vmatprep.subr.mxu0 0.0
      %625 = vmatpush1.msra.mxu0 0.0
      %626 = vmatprep.subr.mxu0 0.0
      %627 = vmatpush1.msra.mxu0 0.0
      %628 = vmatprep.subr.mxu0 0.0
      %629 = vmatpush1.msra.mxu0 0.0
      %630 = vmatprep.subr.mxu0 0.0
      %631 = vmatpush1.msra.mxu0 0.0
      %632 = vmatprep.subr.mxu0 0.0
      %633 = vmatpush1.msra.mxu0 0.0
      %634 = vmatprep.subr.mxu0 0.0
      %635 = vmatpush1.msra.mxu0 0.0
      %636 = vmatprep.subr.mxu0 0.0
      %637 = vmatpush1.msra.mxu0 0.0
      %638 = vmatprep.subr.mxu0 0.0
      %639 = vmatpush1.msra.mxu0 0.0
      %640 = vmatprep.subr.mxu0 0.0
      %641 = vmatpush1.msra.mxu0 0.0
      %642 = vmatprep.mubr.f32.mxu0 0.0
      %643 = vmatmul.mubr.f32.gmra.mrb[0].mxu0 %v531
      %v644 = vpop.f32.mrb[0].mxu0
      %v645 = vadd.f32 %v527, %v644
      %v646 = vpop.f32.mrb[0].mxu0
      %647 = vmatprep.mubr.f32.mxu0 0.0
      %648 = vmatmul.mubr.f32.gmra.mrb[0].mxu0 %v534
      %v649 = vpop.f32.mrb[0].mxu0
      %v650 = vadd.f32 %v527, %v649
      %v651 = vpop.f32.mrb[0].mxu0
      %652 = vmatprep.mubr.f32.mxu0 0.0
      %653 = vmatmul.mubr.f32.gmra.mrb[0].mxu0 %v537
      %v654 = vpop.f32.mrb[0].mxu0
      %v655 = vadd.f32 %v527, %v654
      %v656 = vpop.f32.mrb[0].mxu0
      %657 = vmatprep.mubr.f32.mxu0 0.0
      %658 = vmatmul.mubr.f32.gmra.mrb[0].mxu0 %v540
      %v659 = vpop.f32.mrb[0].mxu0
      %v660 = vadd.f32 %v527, %v659
      %v661 = vpop.f32.mrb[0].mxu0
      %662 = vmatprep.mubr.f32.mxu0 0.0
      %663 = vmatmul.mubr.f32.gmra.mrb[0].mxu0 %v543
      %v664 = vpop.f32.mrb[0].mxu0
      %v665 = vadd.f32 %v527, %v664
      %v666 = vpop.f32.mrb[0].mxu0
      %667 = vmatprep.mubr.f32.mxu0 0.0
      %668 = vmatmul.mubr.f32.gmra.mrb[0].mxu0 %v546
      %v669 = vpop.f32.mrb[0].mxu0
      %v670 = vadd.f32 %v527, %v669
      %v671 = vpop.f32.mrb[0].mxu0
      %672 = vmatprep.mubr.f32.mxu0 0.0
      %673 = vmatmul.mubr.f32.gmra.mrb[0].mxu0 %v549
      %v674 = vpop.f32.mrb[0].mxu0
      %v675 = vadd.f32 %v527, %v674
      %v676 = vpop.f32.mrb[0].mxu0
      %677 = vmatprep.mubr.f32.mxu0 0.0
      %678 = vmatmul.mubr.f32.gmra.mrb[0].mxu0 %v552
      %v679 = vpop.f32.mrb[0].mxu0
      %v680 = vadd.f32 %v527, %v679
      %v681 = vpop.f32.mrb[0].mxu0
      %682 = vmatprep.mubr.f32.mxu0 0.0
      %683 = vmatmul.mubr.f32.gmra.mrb[0].mxu0 %v555
      %v684 = vpop.f32.mrb[0].mxu0
      %v685 = vadd.f32 %v527, %v684
      %v686 = vpop.f32.mrb[0].mxu0
      %687 = vmatprep.mubr.f32.mxu0 0.0
      %688 = vmatmul.mubr.f32.gmra.mrb[0].mxu0 %v558
      %v689 = vpop.f32.mrb[0].mxu0
      %v690 = vadd.f32 %v527, %v689
      %v691 = vpop.f32.mrb[0].mxu0
      %692 = vmatprep.mubr.f32.mxu0 0.0
      %693 = vmatmul.mubr.f32.gmra.mrb[0].mxu0 %v561
      %v694 = vpop.f32.mrb[0].mxu0
      %v695 = vadd.f32 %v527, %v694
      %v696 = vpop.f32.mrb[0].mxu0
      %697 = vmatprep.mubr.f32.mxu0 0.0
      %698 = vmatmul.mubr.f32.gmra.mrb[0].mxu0 %v564
      %v699 = vpop.f32.mrb[0].mxu0
      %v700 = vadd.f32 %v527, %v699
      %v701 = vpop.f32.mrb[0].mxu0
      %702 = vmatprep.mubr.f32.mxu0 0.0
      %703 = vmatmul.mubr.f32.gmra.mrb[0].mxu0 %v567
      %v704 = vpop.f32.mrb[0].mxu0
      %v705 = vadd.f32 %v527, %v704
      %v706 = vpop.f32.mrb[0].mxu0
      %707 = vmatprep.mubr.f32.mxu0 0.0
      %708 = vmatmul.mubr.f32.gmra.mrb[0].mxu0 %v570
      %v709 = vpop.f32.mrb[0].mxu0
      %v710 = vadd.f32 %v527, %v709
      %v711 = vpop.f32.mrb[0].mxu0
      %712 = vmatprep.mubr.f32.mxu0 0.0
      %713 = vmatmul.mubr.f32.gmra.mrb[0].mxu0 %v573
      %v714 = vpop.f32.mrb[0].mxu0
      %v715 = vadd.f32 %v527, %v714
      %v716 = vpop.f32.mrb[0].mxu0
      %717 = vmatprep.mubr.f32.mxu0 0.0
      %718 = vmatmul.mubr.f32.gmra.mrb[0].mxu0 %v576
      %v719 = vpop.f32.mrb[0].mxu0
      %v720 = vadd.f32 %v527, %v719
      %v721 = vpop.f32.mrb[0].mxu0
      %722 = vdwg.mxu0
      %v723 = vmax.f32 %v645, 0.0
      %v724 = vmax.f32 %v650, 0.0
      %v725 = vmax.f32 %v655, 0.0
      %v726 = vmax.f32 %v660, 0.0
      %v727 = vmax.f32 %v665, 0.0
      %v728 = vmax.f32 %v670, 0.0
      %v729 = vmax.f32 %v675, 0.0
      %v730 = vmax.f32 %v680, 0.0
      %v731 = vmax.f32 %v685, 0.0
      %v732 = vmax.f32 %v690, 0.0
      %v733 = vmax.f32 %v695, 0.0
      %v734 = vmax.f32 %v700, 0.0
      %v735 = vmax.f32 %v705, 0.0
      %v736 = vmax.f32 %v710, 0.0
      %v737 = vmax.f32 %v715, 0.0
      %v738 = vmax.f32 %v720, 0.0
      %v739 = vld [vmem:[%s5] sm:$0xff]
      %v740 = vld [vmem:[%s5 + $0x8] sm:$0xff]
      %v741 = vld [vmem:[%s5 + $0x10] sm:$0xff]
      %v742 = vld [vmem:[%s5 + $0x18] sm:$0xff]
      %v743 = vld [vmem:[%s6] sm:$0x1]
      %v745 = vlaneseq
      %v746 = vshrl.u32 %v745, 7
      %v747 = vsub.s32 0, %v746
      %v748 = vrot.slane %v743, %v747
      %v751 = vsel %vm529, %v723, 0
      %v754 = vsel %vm529, %v724, 0
      %v757 = vsel %vm529, %v725, 0
      %v760 = vsel %vm529, %v726, 0
      %v763 = vsel %vm529, %v727, 0
      %v766 = vsel %vm529, %v728, 0
      %v769 = vsel %vm529, %v729, 0
      %v772 = vsel %vm529, %v730, 0
      %v775 = vsel %vm529, %v731, 0
      %v778 = vsel %vm529, %v732, 0
      %v781 = vsel %vm529, %v733, 0
      %v784 = vsel %vm529, %v734, 0
      %v787 = vsel %vm529, %v735, 0
      %v790 = vsel %vm529, %v736, 0
      %v793 = vsel %vm529, %v737, 0
      %v796 = vsel %vm529, %v738, 0
      %798 = vmatprep.subr.mxu0 0.0
      %799 = vmatpush1.msra.mxu0 %v739
      %800 = vmatprep.subr.mxu0 0.0
      %801 = vmatpush1.msra.mxu0 %v740
      %802 = vmatprep.subr.mxu0 0.0
      %803 = vmatpush1.msra.mxu0 %v741
      %804 = vmatprep.subr.mxu0 0.0
      %805 = vmatpush1.msra.mxu0 %v742
      %806 = vmatprep.subr.mxu0 0.0
      %807 = vmatpush1.msra.mxu0 0.0
      %808 = vmatprep.subr.mxu0 0.0
      %809 = vmatpush1.msra.mxu0 0.0
      %810 = vmatprep.subr.mxu0 0.0
      %811 = vmatpush1.msra.mxu0 0.0
      %812 = vmatprep.subr.mxu0 0.0
      %813 = vmatpush1.msra.mxu0 0.0
      %814 = vmatprep.subr.mxu0 0.0
      %815 = vmatpush1.msra.mxu0 0.0
      %816 = vmatprep.subr.mxu0 0.0
      %817 = vmatpush1.msra.mxu0 0.0
      %818 = vmatprep.subr.mxu0 0.0
      %819 = vmatpush1.msra.mxu0 0.0
      %820 = vmatprep.subr.mxu0 0.0
      %821 = vmatpush1.msra.mxu0 0.0
      %822 = vmatprep.subr.mxu0 0.0
      %823 = vmatpush1.msra.mxu0 0.0
      %824 = vmatprep.subr.mxu0 0.0
      %825 = vmatpush1.msra.mxu0 0.0
      %826 = vmatprep.subr.mxu0 0.0
      %827 = vmatpush1.msra.mxu0 0.0
      %828 = vmatprep.subr.mxu0 0.0
      %829 = vmatpush1.msra.mxu0 0.0
      %830 = vmatprep.subr.mxu0 0.0
      %831 = vmatpush1.msra.mxu0 0.0
      %832 = vmatprep.subr.mxu0 0.0
      %833 = vmatpush1.msra.mxu0 0.0
      %834 = vmatprep.subr.mxu0 0.0
      %835 = vmatpush1.msra.mxu0 0.0
      %836 = vmatprep.subr.mxu0 0.0
      %837 = vmatpush1.msra.mxu0 0.0
      %838 = vmatprep.subr.mxu0 0.0
      %839 = vmatpush1.msra.mxu0 0.0
      %840 = vmatprep.subr.mxu0 0.0
      %841 = vmatpush1.msra.mxu0 0.0
      %842 = vmatprep.subr.mxu0 0.0
      %843 = vmatpush1.msra.mxu0 0.0
      %844 = vmatprep.subr.mxu0 0.0
      %845 = vmatpush1.msra.mxu0 0.0
      %846 = vmatprep.subr.mxu0 0.0
      %847 = vmatpush1.msra.mxu0 0.0
      %848 = vmatprep.subr.mxu0 0.0
      %849 = vmatpush1.msra.mxu0 0.0
      %850 = vmatprep.subr.mxu0 0.0
      %851 = vmatpush1.msra.mxu0 0.0
      %852 = vmatprep.subr.mxu0 0.0
      %853 = vmatpush1.msra.mxu0 0.0
      %854 = vmatprep.subr.mxu0 0.0
      %855 = vmatpush1.msra.mxu0 0.0
      %856 = vmatprep.subr.mxu0 0.0
      %857 = vmatpush1.msra.mxu0 0.0
      %858 = vmatprep.subr.mxu0 0.0
      %859 = vmatpush1.msra.mxu0 0.0
      %860 = vmatprep.subr.mxu0 0.0
      %861 = vmatpush1.msra.mxu0 0.0
      %862 = vmatprep.mubr.f32.mxu0 0.0
      %863 = vmatmul.mubr.f32.gmra.mrb[0].mxu0 %v751
      %v864 = vpop.f32.mrb[0].mxu0
      %v865 = vadd.f32 %v748, %v864
      %v866 = vpop.f32.mrb[0].mxu0
      %867 = vmatprep.mubr.f32.mxu0 0.0
      %868 = vmatmul.mubr.f32.gmra.mrb[0].mxu0 %v754
      %v869 = vpop.f32.mrb[0].mxu0
      %v870 = vadd.f32 %v748, %v869
      %v871 = vpop.f32.mrb[0].mxu0
      %872 = vmatprep.mubr.f32.mxu0 0.0
      %873 = vmatmul.mubr.f32.gmra.mrb[0].mxu0 %v757
      %v874 = vpop.f32.mrb[0].mxu0
      %v875 = vadd.f32 %v748, %v874
      %v876 = vpop.f32.mrb[0].mxu0
      %877 = vmatprep.mubr.f32.mxu0 0.0
      %878 = vmatmul.mubr.f32.gmra.mrb[0].mxu0 %v760
      %v879 = vpop.f32.mrb[0].mxu0
      %v880 = vadd.f32 %v748, %v879
      %v881 = vpop.f32.mrb[0].mxu0
      %882 = vmatprep.mubr.f32.mxu0 0.0
      %883 = vmatmul.mubr.f32.gmra.mrb[0].mxu0 %v763
      %v884 = vpop.f32.mrb[0].mxu0
      %v885 = vadd.f32 %v748, %v884
      %v886 = vpop.f32.mrb[0].mxu0
      %887 = vmatprep.mubr.f32.mxu0 0.0
      %888 = vmatmul.mubr.f32.gmra.mrb[0].mxu0 %v766
      %v889 = vpop.f32.mrb[0].mxu0
      %v890 = vadd.f32 %v748, %v889
      %v891 = vpop.f32.mrb[0].mxu0
      %892 = vmatprep.mubr.f32.mxu0 0.0
      %893 = vmatmul.mubr.f32.gmra.mrb[0].mxu0 %v769
      %v894 = vpop.f32.mrb[0].mxu0
      %v895 = vadd.f32 %v748, %v894
      %v896 = vpop.f32.mrb[0].mxu0
      %897 = vmatprep.mubr.f32.mxu0 0.0
      %898 = vmatmul.mubr.f32.gmra.mrb[0].mxu0 %v772
      %v899 = vpop.f32.mrb[0].mxu0
      %v900 = vadd.f32 %v748, %v899
      %v901 = vpop.f32.mrb[0].mxu0
      %902 = vmatprep.mubr.f32.mxu0 0.0
      %903 = vmatmul.mubr.f32.gmra.mrb[0].mxu0 %v775
      %v904 = vpop.f32.mrb[0].mxu0
      %v905 = vadd.f32 %v748, %v904
      %v906 = vpop.f32.mrb[0].mxu0
      %907 = vmatprep.mubr.f32.mxu0 0.0
      %908 = vmatmul.mubr.f32.gmra.mrb[0].mxu0 %v778
      %v909 = vpop.f32.mrb[0].mxu0
      %v910 = vadd.f32 %v748, %v909
      %v911 = vpop.f32.mrb[0].mxu0
      %912 = vmatprep.mubr.f32.mxu0 0.0
      %913 = vmatmul.mubr.f32.gmra.mrb[0].mxu0 %v781
      %v914 = vpop.f32.mrb[0].mxu0
      %v915 = vadd.f32 %v748, %v914
      %v916 = vpop.f32.mrb[0].mxu0
      %917 = vmatprep.mubr.f32.mxu0 0.0
      %918 = vmatmul.mubr.f32.gmra.mrb[0].mxu0 %v784
      %v919 = vpop.f32.mrb[0].mxu0
      %v920 = vadd.f32 %v748, %v919
      %v921 = vpop.f32.mrb[0].mxu0
      %922 = vmatprep.mubr.f32.mxu0 0.0
      %923 = vmatmul.mubr.f32.gmra.mrb[0].mxu0 %v787
      %v924 = vpop.f32.mrb[0].mxu0
      %v925 = vadd.f32 %v748, %v924
      %v926 = vpop.f32.mrb[0].mxu0
      %927 = vmatprep.mubr.f32.mxu0 0.0
      %928 = vmatmul.mubr.f32.gmra.mrb[0].mxu0 %v790
      %v929 = vpop.f32.mrb[0].mxu0
      %v930 = vadd.f32 %v748, %v929
      %v931 = vpop.f32.mrb[0].mxu0
      %932 = vmatprep.mubr.f32.mxu0 0.0
      %933 = vmatmul.mubr.f32.gmra.mrb[0].mxu0 %v793
      %v934 = vpop.f32.mrb[0].mxu0
      %v935 = vadd.f32 %v748, %v934
      %v936 = vpop.f32.mrb[0].mxu0
      %937 = vmatprep.mubr.f32.mxu0 0.0
      %938 = vmatmul.mubr.f32.gmra.mrb[0].mxu0 %v796
      %v939 = vpop.f32.mrb[0].mxu0
      %v940 = vadd.f32 %v748, %v939
      %v941 = vpop.f32.mrb[0].mxu0
      %942 = vdwg.mxu0
      %v943 = vtanh.pop %v865
      %v944 = vtanh.pop %v870
      %v945 = vtanh.pop %v875
      %v946 = vtanh.pop %v880
      %v947 = vtanh.pop %v885
      %v948 = vtanh.pop %v890
      %v949 = vtanh.pop %v895
      %v950 = vtanh.pop %v900
      %v951 = vtanh.pop %v905
      %v952 = vtanh.pop %v910
      %v953 = vtanh.pop %v915
      %v954 = vtanh.pop %v920
      %v955 = vtanh.pop %v925
      %v956 = vtanh.pop %v930
      %v957 = vtanh.pop %v935
      %v958 = vtanh.pop %v940
      %959 = vst [vmem:[%s280] sm:$0xff] %v943
      %960 = vst [vmem:[%s280 + $0x8] sm:$0xff] %v944
      %961 = vst [vmem:[%s280 + $0x10] sm:$0xff] %v945
      %962 = vst [vmem:[%s280 + $0x18] sm:$0xff] %v946
      %963 = vst [vmem:[%s280 + $0x20] sm:$0xff] %v947
      %964 = vst [vmem:[%s280 + $0x28] sm:$0xff] %v948
      %965 = vst [vmem:[%s280 + $0x30] sm:$0xff] %v949
      %966 = vst [vmem:[%s280 + $0x38] sm:$0xff] %v950
      %967 = vst [vmem:[%s280 + $0x40] sm:$0xff] %v951
      %968 = vst [vmem:[%s280 + $0x48] sm:$0xff] %v952
      %969 = vst [vmem:[%s280 + $0x50] sm:$0xff] %v953
      %970 = vst [vmem:[%s280 + $0x58] sm:$0xff] %v954
      %971 = vst [vmem:[%s280 + $0x60] sm:$0xff] %v955
      %972 = vst [vmem:[%s280 + $0x68] sm:$0xff] %v956
      %973 = vst [vmem:[%s280 + $0x70] sm:$0xff] %v957
      %974 = vst [vmem:[%s280 + $0x78] sm:$0xff] %v958
      %s975 = smul.u32 16, %s18
      %p976 = scmp.lt.s32.totalorder %s975, 31
      %s977 = scalar_select %p976, %s975, 31
      %s978 = smul.addr %s977, 8
      %s979 = scalar_lea.vmem %s7, %s978
      // Predicated region
      $region49: #{uth_forward.1} parent=47 // pred_check
        %p980 = pneg %p188
      $region50: #{uth_forward.1} parent=47 // pred_check_branch
        %982 = sbr.rel (%p980) target = $region52
      $region51: #{uth_forward.1} parent=47 // pred_region
        %s983 = smul.u32 16, %s18
      $region52: #{uth_forward.1} parent=47 // pred_fallthru
        _
    $region48: #{uth_forward.1} parent=5 // pred_fallthru
      _
    %p984 = scmp.le.s32.totalorder 2, %s13
    // Predicated region
    $region53: #{uth_forward.1} parent=5 // pred_check
      %p985 = pneg %p984
    $region54: #{uth_forward.1} parent=5 // pred_check_branch
      %987 = sbr.rel (%p985) target = $region56
    $region55: #{uth_forward.1} parent=5 // pred_region
      %s988 = ssub.s32 %s13, 2
      // Predicated region
      $region57: #{uth_forward.1} parent=55 // pred_check
        %p989 = pneg %p194
      $region58: #{uth_forward.1} parent=55 // pred_check_branch
        %991 = sbr.rel (%p989) target = $region60
      $region59: #{uth_forward.1} parent=55 // pred_region
        %s992 = smul.u32 16, %s19
        %p993 = scmp.lt.s32.totalorder %s992, 31
        %s994 = scalar_select %p993, %s992, 31
        %s995 = smul.addr %s994, 8
        %s996 = scalar_lea.vmem %s7, %s995
      $region60: #{uth_forward.1} parent=55 // pred_fallthru
        _
    $region56: #{uth_forward.1} parent=5 // pred_fallthru
      _
  $region6: #{uth_forward.1} parent=0 // loop_footer
    %s17 = sadd.s32 1, %s13
  $region7: #{uth_forward.1} parent=0 // loop_footer_branch
    %12 = sbr.rel target = $region3
  $region8: #{uth_forward.1} parent=0 // loop_exit
    _

</llo_original>
